<compile_context>
chip_gen: v5e
topology: v5e:2x2
jax: 0.10.0
libtpu: 0.0.40
codegen_flags: <defaults>
</compile_context>

<pallas_src>
import functools

import jax
import jax.numpy as jnp
from jax.experimental import pallas as pl
from jax.experimental.pallas import tpu as pltpu


def basic_block_kernel(x_ref, w1_ref, b1_ref, w2_ref, b2_ref, o_ref, *, width):
    # x_ref : (1, Cin, P)  one image; channels on sublanes, P = H*W pixels on lanes
    # w1_ref: (C0, Cin)    bf16, 1x1 conv weights with BN1 scale folded in
    # b1_ref: (C0, 1)      f32, folded BN1 bias
    # w2_ref: (C1, 9*C0)   bf16, 3x3 conv weights, tap-major ((kh*3+kw)*C0 + c0),
    #                      BN2 scale folded in
    # b2_ref: (C1, 1)      f32, folded BN2 bias
    # o_ref : (1, C1, P)
    W = width
    x = x_ref[0].astype(jnp.float32)                         # (Cin, P)
    P = x.shape[1]
    C0 = w1_ref.shape[0]
    C1 = w2_ref.shape[0]

    # ---- conv1 (1x1) + folded BN1 + LeakyReLU(0.1); bf16 into the MXU ----
    h = jnp.dot(w1_ref[...], x.astype(jnp.bfloat16),
                preferred_element_type=jnp.float32)          # (C0, P) f32
    h = h + b1_ref[...]
    h = jnp.where(h >= 0, h, 0.1 * h)

    # ---- build the 9 zero-padded 3x3 taps:
    #      tap[dy,dx][c, i*W + j] = h[c, (i+dy)*W + (j+dx)]  (0 outside the image)
    # Shift along the flat pixel (lane) axis with pltpu.roll and mask wrapped /
    # out-of-image entries with iota comparisons.  No padded scratch, no Ref
    # slicing, no relayout copies.
    pos = jax.lax.broadcasted_iota(jnp.int32, (1, P), 1)     # flat pixel index p
    col = pos % W                                            # column j within a row
    taps = []
    for dy in (-1, 0, 1):
        for dx in (-1, 0, 1):
            k = dy * W + dx
            if k == 0:
                taps.append(h)
                continue
            s = pltpu.roll(h, shift=(-k) % P, axis=1)        # s[c, p] = h[c, (p+k) % P]
            valid = (pos + k >= 0) & (pos + k < P)           # row stays inside image
            if dx == 1:
                valid = valid & (col < W - 1)                # no wrap to next row
            elif dx == -1:
                valid = valid & (col >= 1)                   # no wrap to prev row
            taps.append(jnp.where(valid, s, 0.0))

    # ---- conv2 (3x3, pad=1) + folded BN2 + LeakyReLU(0.1) ----
    if C0 % 8 == 0:
        # Production channel counts: fuse into one im2col matmul
        # (single MXU push with K = 9*C0 instead of 9 skinny ones).
        patches = jnp.concatenate(taps, axis=0).astype(jnp.bfloat16)   # (9*C0, P)
        acc = jnp.dot(w2_ref[...], patches,
                      preferred_element_type=jnp.float32)              # (C1, P)
    else:
        # Tiny / sublane-unaligned C0 (unit test shapes): 9 accumulated matmuls.
        w2 = w2_ref[...]                                               # (C1, 9*C0) bf16
        acc = jnp.zeros((C1, P), jnp.float32)
        for t, s in enumerate(taps):
            acc = acc + jnp.dot(w2[:, t * C0:(t + 1) * C0],
                                s.astype(jnp.bfloat16),
                                preferred_element_type=jnp.float32)

    acc = acc + b2_ref[...]
    acc = jnp.where(acc >= 0, acc, 0.1 * acc)

    # ---- residual add (C1 == Cin) and lane-dense store ----
    o_ref[0] = (acc + x).astype(o_ref.dtype)


def basic_block(x_nchw, w1, b1, w2, b2):
    """x_nchw: (N, Cin, H, W).  w1: (C0, Cin) bf16, b1: (C0, 1) f32,
    w2: (C1, 9*C0) bf16 (tap-major), b2: (C1, 1) f32.  Returns (N, Cin, H, W)."""
    N, Cin, H, W = x_nchw.shape
    C0 = w1.shape[0]
    C1 = w2.shape[0]
    assert C1 == Cin, "residual add requires planes[1] == inplanes"
    P = H * W

    # Free view change: NCHW is already channel-major / pixel-minor.
    x = x_nchw.reshape(N, Cin, P)

    kernel = functools.partial(basic_block_kernel, width=W)
    out = pl.pallas_call(
        kernel,
        out_shape=jax.ShapeDtypeStruct((N, C1, P), x_nchw.dtype),
        grid_spec=pltpu.PrefetchScalarGridSpec(
            num_scalar_prefetch=0,
            grid=(N,),
            in_specs=[
                pl.BlockSpec((1, Cin, P), lambda n: (n, 0, 0)),
                pl.BlockSpec((C0, Cin), lambda n: (0, 0)),
                pl.BlockSpec((C0, 1), lambda n: (0, 0)),
                pl.BlockSpec((C1, 9 * C0), lambda n: (0, 0)),
                pl.BlockSpec((C1, 1), lambda n: (0, 0)),
            ],
            out_specs=pl.BlockSpec((1, C1, P), lambda n: (n, 0, 0)),
        ),
        compiler_params=pltpu.CompilerParams(
            dimension_semantics=("parallel",),
            vmem_limit_bytes=32 * 1024 * 1024,
        ),
    )(x, w1, b1, w2, b2)

    return out.reshape(N, C1, H, W)                          # free view change


def reference_forward(x, w1_t, scale1, bias1, w2_t, scale2, bias2):
    """Pure-JAX reference mirroring the PyTorch forward (eval-mode BN)."""
    dn = ('NCHW', 'OIHW', 'NCHW')
    out = jax.lax.conv_general_dilated(x, w1_t, (1, 1), 'VALID',
                                       dimension_numbers=dn)
    out = out * scale1[None, :, None, None] + bias1[None, :, None, None]
    out = jnp.where(out >= 0, out, 0.1 * out)
    out = jax.lax.conv_general_dilated(out, w2_t, (1, 1), ((1, 1), (1, 1)),
                                       dimension_numbers=dn)
    out = out * scale2[None, :, None, None] + bias2[None, :, None, None]
    out = jnp.where(out >= 0, out, 0.1 * out)
    return out + x


if __name__ == "__main__":
    # BasicBlock(inplanes=4, planes=[2, 4]); input (N=2, C=4, H=16, W=16)
    inplanes = 4
    planes = (2, 4)
    N, H, W = 2, 16, 16
    eps = 1e-5

    key = jax.random.PRNGKey(0)
    ks = jax.random.split(key, 11)

    # conv weights in PyTorch OIHW layout, deterministic
    w1_t = jax.random.normal(ks[0], (planes[0], inplanes, 1, 1), jnp.float32) * 0.3
    w2_t = jax.random.normal(ks[1], (planes[1], planes[0], 3, 3), jnp.float32) * 0.3

    # BatchNorm parameters / running stats (eval mode), deterministic
    g1 = 0.5 + jax.random.uniform(ks[2], (planes[0],), jnp.float32)
    be1 = 0.1 * jax.random.normal(ks[3], (planes[0],), jnp.float32)
    m1 = 0.1 * jax.random.normal(ks[4], (planes[0],), jnp.float32)
    v1 = 0.5 + jax.random.uniform(ks[5], (planes[0],), jnp.float32)
    g2 = 0.5 + jax.random.uniform(ks[6], (planes[1],), jnp.float32)
    be2 = 0.1 * jax.random.normal(ks[7], (planes[1],), jnp.float32)
    m2 = 0.1 * jax.random.normal(ks[8], (planes[1],), jnp.float32)
    v2 = 0.5 + jax.random.uniform(ks[9], (planes[1],), jnp.float32)

    # Fold BN into per-channel scale/bias (eval mode)
    scale1 = g1 / jnp.sqrt(v1 + eps)
    bias1 = be1 - m1 * scale1
    scale2 = g2 / jnp.sqrt(v2 + eps)
    bias2 = be2 - m2 * scale2

    # Fold the BN scales into the conv weights (per output channel) and cast the
    # MXU operands to bf16; biases stay f32.
    w1s = (w1_t[:, :, 0, 0] * scale1[:, None]).astype(jnp.bfloat16)       # (C0, Cin)
    w2s = (jnp.transpose(w2_t * scale2[:, None, None, None], (0, 2, 3, 1))
           .reshape(planes[1], 9 * planes[0])).astype(jnp.bfloat16)       # (C1, 9*C0)
    b1 = bias1[:, None].astype(jnp.float32)                               # (C0, 1)
    b2 = bias2[:, None].astype(jnp.float32)                               # (C1, 1)

    x = jax.random.normal(ks[10], (N, inplanes, H, W), jnp.float32)

    out = basic_block(x, w1s, b1, w2s, b2)
    out = jax.block_until_ready(out)

    ref = reference_forward(x, w1_t, scale1, bias1, w2_t, scale2, bias2)
    assert out.shape == ref.shape == (N, inplanes, H, W)
    # bf16 MXU operands -> looser tolerance than the all-f32 version.
    assert jnp.allclose(out, ref, atol=5e-2, rtol=5e-2), "mismatch vs reference"

    print("KERNEL_OK")
</pallas_src>

<mosaic_0001>
module attributes {stable_mosaic.version = 11 : i64} {
  func.func @basic_block_kernel(%arg0: i32, %arg1: memref<1x4x256xf32, #tpu.memory_space<vmem>>, %arg2: memref<2x4xbf16, #tpu.memory_space<vmem>>, %arg3: memref<2x1xf32, #tpu.memory_space<vmem>>, %arg4: memref<4x18xbf16, #tpu.memory_space<vmem>>, %arg5: memref<4x1xf32, #tpu.memory_space<vmem>>, %arg6: memref<1x4x256xf32, #tpu.memory_space<vmem>>) attributes {dimension_semantics = [#tpu.dimension_semantics<parallel>], iteration_bounds = array<i64: 2>, scalar_prefetch = 0 : i64, scratch_operands = 0 : i64, tpu.core_type = #tpu.core_type<tc>, window_params = [{transform_indices = @transform_0, window_bounds = array<i64: 1, 4, 256>}, {pipeline_mode = #tpu.pipeline_mode<synchronous>, transform_indices = @transform_1, window_bounds = array<i64: 2, 4>}, {pipeline_mode = #tpu.pipeline_mode<synchronous>, transform_indices = @transform_2, window_bounds = array<i64: 2, 1>}, {pipeline_mode = #tpu.pipeline_mode<synchronous>, transform_indices = @transform_3, window_bounds = array<i64: 4, 18>}, {pipeline_mode = #tpu.pipeline_mode<synchronous>, transform_indices = @transform_4, window_bounds = array<i64: 4, 1>}, {transform_indices = @transform_5, window_bounds = array<i64: 1, 4, 256>}]} {
    %c0 = arith.constant 0 : index
    %c0_0 = arith.constant 0 : index
    %c0_1 = arith.constant 0 : index
    %0 = vector.load %arg1[%c0, %c0_0, %c0_1] : memref<1x4x256xf32, #tpu.memory_space<vmem>>, vector<1x4x256xf32>
    %1 = vector.shape_cast %0 : vector<1x4x256xf32> to vector<4x256xf32>
    %c0_2 = arith.constant 0 : index
    %c0_3 = arith.constant 0 : index
    %2 = vector.load %arg2[%c0_2, %c0_3] : memref<2x4xbf16, #tpu.memory_space<vmem>>, vector<2x4xbf16>
    %3 = arith.truncf %1 : vector<4x256xf32> to vector<4x256xbf16>
    %cst = arith.constant dense<0.000000e+00> : vector<2x256xf32>
    %4 = tpu.matmul %2, %3, %cst {dimension_numbers = #tpu.dot_dimension_numbers<[1], [0], [0], [1], [0, 0, 1, 1], [], []>} : vector<2x4xbf16>, vector<4x256xbf16>, vector<2x256xf32> -> vector<2x256xf32>
    %c0_4 = arith.constant 0 : index
    %c0_5 = arith.constant 0 : index
    %5 = vector.load %arg3[%c0_4, %c0_5] : memref<2x1xf32, #tpu.memory_space<vmem>>, vector<2x1xf32>
    %6 = vector.broadcast %5 : vector<2x1xf32> to vector<2x256xf32>
    %7 = arith.addf %4, %6 : vector<2x256xf32>
    %cst_6 = arith.constant 0.000000e+00 : f32
    %8 = vector.broadcast %cst_6 : f32 to vector<2x256xf32>
    %9 = arith.cmpf oge, %7, %8 : vector<2x256xf32>
    %cst_7 = arith.constant 1.000000e-01 : f32
    %10 = vector.broadcast %cst_7 : f32 to vector<2x256xf32>
    %11 = arith.mulf %10, %7 : vector<2x256xf32>
    %12 = arith.select %9, %7, %11 : vector<2x256xi1>, vector<2x256xf32>
    %13 = tpu.iota {dimensions = array<i32: 1>} : vector<1x256xi32>
    %c16_i32 = arith.constant 16 : i32
    %c0_i32 = arith.constant 0 : i32
    %14 = arith.cmpi eq, %c16_i32, %c0_i32 : i32
    %c1_i32 = arith.constant 1 : i32
    %15 = arith.select %14, %c1_i32, %c16_i32 : i32
    %16 = vector.broadcast %15 : i32 to vector<1x256xi32>
    %17 = arith.remsi %13, %16 : vector<1x256xi32>
    %c0_i32_8 = arith.constant 0 : i32
    %18 = vector.broadcast %c0_i32_8 : i32 to vector<1x256xi32>
    %19 = arith.cmpi ne, %17, %18 : vector<1x256xi32>
    %c0_i32_9 = arith.constant 0 : i32
    %20 = vector.broadcast %c0_i32_9 : i32 to vector<1x256xi32>
    %21 = arith.cmpi slt, %17, %20 : vector<1x256xi32>
    %c0_i32_10 = arith.constant 0 : i32
    %22 = arith.cmpi slt, %15, %c0_i32_10 : i32
    %23 = vector.broadcast %22 : i1 to vector<1x256xi1>
    %24 = vector.broadcast %23 : vector<1x256xi1> to vector<1x256xi1>
    %25 = arith.xori %21, %24 : vector<1x256xi1>
    %26 = arith.andi %25, %19 : vector<1x256xi1>
    %27 = vector.broadcast %15 : i32 to vector<1x256xi32>
    %28 = arith.addi %17, %27 : vector<1x256xi32>
    %29 = arith.select %26, %28, %17 : vector<1x256xi1>, vector<1x256xi32>
    %c17_i32 = arith.constant 17 : i32
    %30 = tpu.dynamic_rotate %12 by %c17_i32 dim 1 : vector<2x256xf32>, i32 -> vector<2x256xf32>
    %c-17_i32 = arith.constant -17 : i32
    %31 = vector.broadcast %c-17_i32 : i32 to vector<1x256xi32>
    %32 = arith.addi %13, %31 : vector<1x256xi32>
    %c0_i32_11 = arith.constant 0 : i32
    %33 = vector.broadcast %c0_i32_11 : i32 to vector<1x256xi32>
    %34 = arith.cmpi sge, %32, %33 : vector<1x256xi32>
    %c-17_i32_12 = arith.constant -17 : i32
    %35 = vector.broadcast %c-17_i32_12 : i32 to vector<1x256xi32>
    %36 = arith.addi %13, %35 : vector<1x256xi32>
    %c256_i32 = arith.constant 256 : i32
    %37 = vector.broadcast %c256_i32 : i32 to vector<1x256xi32>
    %38 = arith.cmpi slt, %36, %37 : vector<1x256xi32>
    %39 = arith.andi %34, %38 : vector<1x256xi1>
    %c1_i32_13 = arith.constant 1 : i32
    %40 = vector.broadcast %c1_i32_13 : i32 to vector<1x256xi32>
    %41 = arith.cmpi sge, %29, %40 : vector<1x256xi32>
    %42 = arith.andi %39, %41 : vector<1x256xi1>
    %cst_14 = arith.constant 0.000000e+00 : f32
    %43 = vector.shape_cast %42 : vector<1x256xi1> to vector<1x256xi1>
    %44 = vector.broadcast %43 : vector<1x256xi1> to vector<2x256xi1>
    %45 = vector.broadcast %cst_14 : f32 to vector<2x256xf32>
    %46 = arith.select %44, %30, %45 : vector<2x256xi1>, vector<2x256xf32>
    %c16_i32_15 = arith.constant 16 : i32
    %47 = tpu.dynamic_rotate %12 by %c16_i32_15 dim 1 : vector<2x256xf32>, i32 -> vector<2x256xf32>
    %c-16_i32 = arith.constant -16 : i32
    %48 = vector.broadcast %c-16_i32 : i32 to vector<1x256xi32>
    %49 = arith.addi %13, %48 : vector<1x256xi32>
    %c0_i32_16 = arith.constant 0 : i32
    %50 = vector.broadcast %c0_i32_16 : i32 to vector<1x256xi32>
    %51 = arith.cmpi sge, %49, %50 : vector<1x256xi32>
    %c-16_i32_17 = arith.constant -16 : i32
    %52 = vector.broadcast %c-16_i32_17 : i32 to vector<1x256xi32>
    %53 = arith.addi %13, %52 : vector<1x256xi32>
    %c256_i32_18 = arith.constant 256 : i32
    %54 = vector.broadcast %c256_i32_18 : i32 to vector<1x256xi32>
    %55 = arith.cmpi slt, %53, %54 : vector<1x256xi32>
    %56 = arith.andi %51, %55 : vector<1x256xi1>
    %cst_19 = arith.constant 0.000000e+00 : f32
    %57 = vector.shape_cast %56 : vector<1x256xi1> to vector<1x256xi1>
    %58 = vector.broadcast %57 : vector<1x256xi1> to vector<2x256xi1>
    %59 = vector.broadcast %cst_19 : f32 to vector<2x256xf32>
    %60 = arith.select %58, %47, %59 : vector<2x256xi1>, vector<2x256xf32>
    %c15_i32 = arith.constant 15 : i32
    %61 = tpu.dynamic_rotate %12 by %c15_i32 dim 1 : vector<2x256xf32>, i32 -> vector<2x256xf32>
    %c-15_i32 = arith.constant -15 : i32
    %62 = vector.broadcast %c-15_i32 : i32 to vector<1x256xi32>
    %63 = arith.addi %13, %62 : vector<1x256xi32>
    %c0_i32_20 = arith.constant 0 : i32
    %64 = vector.broadcast %c0_i32_20 : i32 to vector<1x256xi32>
    %65 = arith.cmpi sge, %63, %64 : vector<1x256xi32>
    %c-15_i32_21 = arith.constant -15 : i32
    %66 = vector.broadcast %c-15_i32_21 : i32 to vector<1x256xi32>
    %67 = arith.addi %13, %66 : vector<1x256xi32>
    %c256_i32_22 = arith.constant 256 : i32
    %68 = vector.broadcast %c256_i32_22 : i32 to vector<1x256xi32>
    %69 = arith.cmpi slt, %67, %68 : vector<1x256xi32>
    %70 = arith.andi %65, %69 : vector<1x256xi1>
    %c15_i32_23 = arith.constant 15 : i32
    %71 = vector.broadcast %c15_i32_23 : i32 to vector<1x256xi32>
    %72 = arith.cmpi slt, %29, %71 : vector<1x256xi32>
    %73 = arith.andi %70, %72 : vector<1x256xi1>
    %cst_24 = arith.constant 0.000000e+00 : f32
    %74 = vector.shape_cast %73 : vector<1x256xi1> to vector<1x256xi1>
    %75 = vector.broadcast %74 : vector<1x256xi1> to vector<2x256xi1>
    %76 = vector.broadcast %cst_24 : f32 to vector<2x256xf32>
    %77 = arith.select %75, %61, %76 : vector<2x256xi1>, vector<2x256xf32>
    %c1_i32_25 = arith.constant 1 : i32
    %78 = tpu.dynamic_rotate %12 by %c1_i32_25 dim 1 : vector<2x256xf32>, i32 -> vector<2x256xf32>
    %c-1_i32 = arith.constant -1 : i32
    %79 = vector.broadcast %c-1_i32 : i32 to vector<1x256xi32>
    %80 = arith.addi %13, %79 : vector<1x256xi32>
    %c0_i32_26 = arith.constant 0 : i32
    %81 = vector.broadcast %c0_i32_26 : i32 to vector<1x256xi32>
    %82 = arith.cmpi sge, %80, %81 : vector<1x256xi32>
    %c-1_i32_27 = arith.constant -1 : i32
    %83 = vector.broadcast %c-1_i32_27 : i32 to vector<1x256xi32>
    %84 = arith.addi %13, %83 : vector<1x256xi32>
    %c256_i32_28 = arith.constant 256 : i32
    %85 = vector.broadcast %c256_i32_28 : i32 to vector<1x256xi32>
    %86 = arith.cmpi slt, %84, %85 : vector<1x256xi32>
    %87 = arith.andi %82, %86 : vector<1x256xi1>
    %c1_i32_29 = arith.constant 1 : i32
    %88 = vector.broadcast %c1_i32_29 : i32 to vector<1x256xi32>
    %89 = arith.cmpi sge, %29, %88 : vector<1x256xi32>
    %90 = arith.andi %87, %89 : vector<1x256xi1>
    %cst_30 = arith.constant 0.000000e+00 : f32
    %91 = vector.shape_cast %90 : vector<1x256xi1> to vector<1x256xi1>
    %92 = vector.broadcast %91 : vector<1x256xi1> to vector<2x256xi1>
    %93 = vector.broadcast %cst_30 : f32 to vector<2x256xf32>
    %94 = arith.select %92, %78, %93 : vector<2x256xi1>, vector<2x256xf32>
    %c255_i32 = arith.constant 255 : i32
    %95 = tpu.dynamic_rotate %12 by %c255_i32 dim 1 : vector<2x256xf32>, i32 -> vector<2x256xf32>
    %c1_i32_31 = arith.constant 1 : i32
    %96 = vector.broadcast %c1_i32_31 : i32 to vector<1x256xi32>
    %97 = arith.addi %13, %96 : vector<1x256xi32>
    %c0_i32_32 = arith.constant 0 : i32
    %98 = vector.broadcast %c0_i32_32 : i32 to vector<1x256xi32>
    %99 = arith.cmpi sge, %97, %98 : vector<1x256xi32>
    %c1_i32_33 = arith.constant 1 : i32
    %100 = vector.broadcast %c1_i32_33 : i32 to vector<1x256xi32>
    %101 = arith.addi %13, %100 : vector<1x256xi32>
    %c256_i32_34 = arith.constant 256 : i32
    %102 = vector.broadcast %c256_i32_34 : i32 to vector<1x256xi32>
    %103 = arith.cmpi slt, %101, %102 : vector<1x256xi32>
    %104 = arith.andi %99, %103 : vector<1x256xi1>
    %c15_i32_35 = arith.constant 15 : i32
    %105 = vector.broadcast %c15_i32_35 : i32 to vector<1x256xi32>
    %106 = arith.cmpi slt, %29, %105 : vector<1x256xi32>
    %107 = arith.andi %104, %106 : vector<1x256xi1>
    %cst_36 = arith.constant 0.000000e+00 : f32
    %108 = vector.shape_cast %107 : vector<1x256xi1> to vector<1x256xi1>
    %109 = vector.broadcast %108 : vector<1x256xi1> to vector<2x256xi1>
    %110 = vector.broadcast %cst_36 : f32 to vector<2x256xf32>
    %111 = arith.select %109, %95, %110 : vector<2x256xi1>, vector<2x256xf32>
    %c241_i32 = arith.constant 241 : i32
    %112 = tpu.dynamic_rotate %12 by %c241_i32 dim 1 : vector<2x256xf32>, i32 -> vector<2x256xf32>
    %c15_i32_37 = arith.constant 15 : i32
    %113 = vector.broadcast %c15_i32_37 : i32 to vector<1x256xi32>
    %114 = arith.addi %13, %113 : vector<1x256xi32>
    %c0_i32_38 = arith.constant 0 : i32
    %115 = vector.broadcast %c0_i32_38 : i32 to vector<1x256xi32>
    %116 = arith.cmpi sge, %114, %115 : vector<1x256xi32>
    %c15_i32_39 = arith.constant 15 : i32
    %117 = vector.broadcast %c15_i32_39 : i32 to vector<1x256xi32>
    %118 = arith.addi %13, %117 : vector<1x256xi32>
    %c256_i32_40 = arith.constant 256 : i32
    %119 = vector.broadcast %c256_i32_40 : i32 to vector<1x256xi32>
    %120 = arith.cmpi slt, %118, %119 : vector<1x256xi32>
    %121 = arith.andi %116, %120 : vector<1x256xi1>
    %c1_i32_41 = arith.constant 1 : i32
    %122 = vector.broadcast %c1_i32_41 : i32 to vector<1x256xi32>
    %123 = arith.cmpi sge, %29, %122 : vector<1x256xi32>
    %124 = arith.andi %121, %123 : vector<1x256xi1>
    %cst_42 = arith.constant 0.000000e+00 : f32
    %125 = vector.shape_cast %124 : vector<1x256xi1> to vector<1x256xi1>
    %126 = vector.broadcast %125 : vector<1x256xi1> to vector<2x256xi1>
    %127 = vector.broadcast %cst_42 : f32 to vector<2x256xf32>
    %128 = arith.select %126, %112, %127 : vector<2x256xi1>, vector<2x256xf32>
    %c240_i32 = arith.constant 240 : i32
    %129 = tpu.dynamic_rotate %12 by %c240_i32 dim 1 : vector<2x256xf32>, i32 -> vector<2x256xf32>
    %c16_i32_43 = arith.constant 16 : i32
    %130 = vector.broadcast %c16_i32_43 : i32 to vector<1x256xi32>
    %131 = arith.addi %13, %130 : vector<1x256xi32>
    %c0_i32_44 = arith.constant 0 : i32
    %132 = vector.broadcast %c0_i32_44 : i32 to vector<1x256xi32>
    %133 = arith.cmpi sge, %131, %132 : vector<1x256xi32>
    %c16_i32_45 = arith.constant 16 : i32
    %134 = vector.broadcast %c16_i32_45 : i32 to vector<1x256xi32>
    %135 = arith.addi %13, %134 : vector<1x256xi32>
    %c256_i32_46 = arith.constant 256 : i32
    %136 = vector.broadcast %c256_i32_46 : i32 to vector<1x256xi32>
    %137 = arith.cmpi slt, %135, %136 : vector<1x256xi32>
    %138 = arith.andi %133, %137 : vector<1x256xi1>
    %cst_47 = arith.constant 0.000000e+00 : f32
    %139 = vector.shape_cast %138 : vector<1x256xi1> to vector<1x256xi1>
    %140 = vector.broadcast %139 : vector<1x256xi1> to vector<2x256xi1>
    %141 = vector.broadcast %cst_47 : f32 to vector<2x256xf32>
    %142 = arith.select %140, %129, %141 : vector<2x256xi1>, vector<2x256xf32>
    %c239_i32 = arith.constant 239 : i32
    %143 = tpu.dynamic_rotate %12 by %c239_i32 dim 1 : vector<2x256xf32>, i32 -> vector<2x256xf32>
    %c17_i32_48 = arith.constant 17 : i32
    %144 = vector.broadcast %c17_i32_48 : i32 to vector<1x256xi32>
    %145 = arith.addi %13, %144 : vector<1x256xi32>
    %c0_i32_49 = arith.constant 0 : i32
    %146 = vector.broadcast %c0_i32_49 : i32 to vector<1x256xi32>
    %147 = arith.cmpi sge, %145, %146 : vector<1x256xi32>
    %c17_i32_50 = arith.constant 17 : i32
    %148 = vector.broadcast %c17_i32_50 : i32 to vector<1x256xi32>
    %149 = arith.addi %13, %148 : vector<1x256xi32>
    %c256_i32_51 = arith.constant 256 : i32
    %150 = vector.broadcast %c256_i32_51 : i32 to vector<1x256xi32>
    %151 = arith.cmpi slt, %149, %150 : vector<1x256xi32>
    %152 = arith.andi %147, %151 : vector<1x256xi1>
    %c15_i32_52 = arith.constant 15 : i32
    %153 = vector.broadcast %c15_i32_52 : i32 to vector<1x256xi32>
    %154 = arith.cmpi slt, %29, %153 : vector<1x256xi32>
    %155 = arith.andi %152, %154 : vector<1x256xi1>
    %cst_53 = arith.constant 0.000000e+00 : f32
    %156 = vector.shape_cast %155 : vector<1x256xi1> to vector<1x256xi1>
    %157 = vector.broadcast %156 : vector<1x256xi1> to vector<2x256xi1>
    %158 = vector.broadcast %cst_53 : f32 to vector<2x256xf32>
    %159 = arith.select %157, %143, %158 : vector<2x256xi1>, vector<2x256xf32>
    %c0_54 = arith.constant 0 : index
    %c0_55 = arith.constant 0 : index
    %160 = vector.load %arg4[%c0_54, %c0_55] : memref<4x18xbf16, #tpu.memory_space<vmem>>, vector<4x18xbf16>
    %cst_56 = arith.constant 0.000000e+00 : f32
    %161 = vector.broadcast %cst_56 : f32 to vector<4x256xf32>
    %162 = vector.extract_strided_slice %160 {offsets = [0, 0], sizes = [4, 2], strides = [1, 1]} : vector<4x18xbf16> to vector<4x2xbf16>
    %163 = arith.truncf %46 : vector<2x256xf32> to vector<2x256xbf16>
    %cst_57 = arith.constant dense<0.000000e+00> : vector<4x256xf32>
    %164 = tpu.matmul %162, %163, %cst_57 {dimension_numbers = #tpu.dot_dimension_numbers<[1], [0], [0], [1], [0, 0, 1, 1], [], []>} : vector<4x2xbf16>, vector<2x256xbf16>, vector<4x256xf32> -> vector<4x256xf32>
    %165 = arith.addf %161, %164 : vector<4x256xf32>
    %166 = vector.extract_strided_slice %160 {offsets = [0, 2], sizes = [4, 2], strides = [1, 1]} : vector<4x18xbf16> to vector<4x2xbf16>
    %167 = arith.truncf %60 : vector<2x256xf32> to vector<2x256xbf16>
    %cst_58 = arith.constant dense<0.000000e+00> : vector<4x256xf32>
    %168 = tpu.matmul %166, %167, %cst_58 {dimension_numbers = #tpu.dot_dimension_numbers<[1], [0], [0], [1], [0, 0, 1, 1], [], []>} : vector<4x2xbf16>, vector<2x256xbf16>, vector<4x256xf32> -> vector<4x256xf32>
    %169 = arith.addf %165, %168 : vector<4x256xf32>
    %170 = vector.extract_strided_slice %160 {offsets = [0, 4], sizes = [4, 2], strides = [1, 1]} : vector<4x18xbf16> to vector<4x2xbf16>
    %171 = arith.truncf %77 : vector<2x256xf32> to vector<2x256xbf16>
    %cst_59 = arith.constant dense<0.000000e+00> : vector<4x256xf32>
    %172 = tpu.matmul %170, %171, %cst_59 {dimension_numbers = #tpu.dot_dimension_numbers<[1], [0], [0], [1], [0, 0, 1, 1], [], []>} : vector<4x2xbf16>, vector<2x256xbf16>, vector<4x256xf32> -> vector<4x256xf32>
    %173 = arith.addf %169, %172 : vector<4x256xf32>
    %174 = vector.extract_strided_slice %160 {offsets = [0, 6], sizes = [4, 2], strides = [1, 1]} : vector<4x18xbf16> to vector<4x2xbf16>
    %175 = arith.truncf %94 : vector<2x256xf32> to vector<2x256xbf16>
    %cst_60 = arith.constant dense<0.000000e+00> : vector<4x256xf32>
    %176 = tpu.matmul %174, %175, %cst_60 {dimension_numbers = #tpu.dot_dimension_numbers<[1], [0], [0], [1], [0, 0, 1, 1], [], []>} : vector<4x2xbf16>, vector<2x256xbf16>, vector<4x256xf32> -> vector<4x256xf32>
    %177 = arith.addf %173, %176 : vector<4x256xf32>
    %178 = vector.extract_strided_slice %160 {offsets = [0, 8], sizes = [4, 2], strides = [1, 1]} : vector<4x18xbf16> to vector<4x2xbf16>
    %179 = arith.truncf %12 : vector<2x256xf32> to vector<2x256xbf16>
    %cst_61 = arith.constant dense<0.000000e+00> : vector<4x256xf32>
    %180 = tpu.matmul %178, %179, %cst_61 {dimension_numbers = #tpu.dot_dimension_numbers<[1], [0], [0], [1], [0, 0, 1, 1], [], []>} : vector<4x2xbf16>, vector<2x256xbf16>, vector<4x256xf32> -> vector<4x256xf32>
    %181 = arith.addf %177, %180 : vector<4x256xf32>
    %182 = vector.extract_strided_slice %160 {offsets = [0, 10], sizes = [4, 2], strides = [1, 1]} : vector<4x18xbf16> to vector<4x2xbf16>
    %183 = arith.truncf %111 : vector<2x256xf32> to vector<2x256xbf16>
    %cst_62 = arith.constant dense<0.000000e+00> : vector<4x256xf32>
    %184 = tpu.matmul %182, %183, %cst_62 {dimension_numbers = #tpu.dot_dimension_numbers<[1], [0], [0], [1], [0, 0, 1, 1], [], []>} : vector<4x2xbf16>, vector<2x256xbf16>, vector<4x256xf32> -> vector<4x256xf32>
    %185 = arith.addf %181, %184 : vector<4x256xf32>
    %186 = vector.extract_strided_slice %160 {offsets = [0, 12], sizes = [4, 2], strides = [1, 1]} : vector<4x18xbf16> to vector<4x2xbf16>
    %187 = arith.truncf %128 : vector<2x256xf32> to vector<2x256xbf16>
    %cst_63 = arith.constant dense<0.000000e+00> : vector<4x256xf32>
    %188 = tpu.matmul %186, %187, %cst_63 {dimension_numbers = #tpu.dot_dimension_numbers<[1], [0], [0], [1], [0, 0, 1, 1], [], []>} : vector<4x2xbf16>, vector<2x256xbf16>, vector<4x256xf32> -> vector<4x256xf32>
    %189 = arith.addf %185, %188 : vector<4x256xf32>
    %190 = vector.extract_strided_slice %160 {offsets = [0, 14], sizes = [4, 2], strides = [1, 1]} : vector<4x18xbf16> to vector<4x2xbf16>
    %191 = arith.truncf %142 : vector<2x256xf32> to vector<2x256xbf16>
    %cst_64 = arith.constant dense<0.000000e+00> : vector<4x256xf32>
    %192 = tpu.matmul %190, %191, %cst_64 {dimension_numbers = #tpu.dot_dimension_numbers<[1], [0], [0], [1], [0, 0, 1, 1], [], []>} : vector<4x2xbf16>, vector<2x256xbf16>, vector<4x256xf32> -> vector<4x256xf32>
    %193 = arith.addf %189, %192 : vector<4x256xf32>
    %194 = vector.extract_strided_slice %160 {offsets = [0, 16], sizes = [4, 2], strides = [1, 1]} : vector<4x18xbf16> to vector<4x2xbf16>
    %195 = arith.truncf %159 : vector<2x256xf32> to vector<2x256xbf16>
    %cst_65 = arith.constant dense<0.000000e+00> : vector<4x256xf32>
    %196 = tpu.matmul %194, %195, %cst_65 {dimension_numbers = #tpu.dot_dimension_numbers<[1], [0], [0], [1], [0, 0, 1, 1], [], []>} : vector<4x2xbf16>, vector<2x256xbf16>, vector<4x256xf32> -> vector<4x256xf32>
    %197 = arith.addf %193, %196 : vector<4x256xf32>
    %c0_66 = arith.constant 0 : index
    %c0_67 = arith.constant 0 : index
    %198 = vector.load %arg5[%c0_66, %c0_67] : memref<4x1xf32, #tpu.memory_space<vmem>>, vector<4x1xf32>
    %199 = vector.broadcast %198 : vector<4x1xf32> to vector<4x256xf32>
    %200 = arith.addf %197, %199 : vector<4x256xf32>
    %cst_68 = arith.constant 0.000000e+00 : f32
    %201 = vector.broadcast %cst_68 : f32 to vector<4x256xf32>
    %202 = arith.cmpf oge, %200, %201 : vector<4x256xf32>
    %cst_69 = arith.constant 1.000000e-01 : f32
    %203 = vector.broadcast %cst_69 : f32 to vector<4x256xf32>
    %204 = arith.mulf %203, %200 : vector<4x256xf32>
    %205 = arith.select %202, %200, %204 : vector<4x256xi1>, vector<4x256xf32>
    %206 = arith.addf %205, %1 : vector<4x256xf32>
    %c0_70 = arith.constant 0 : index
    %c0_71 = arith.constant 0 : index
    %c0_72 = arith.constant 0 : index
    %207 = vector.load %arg6[%c0_70, %c0_71, %c0_72] : memref<1x4x256xf32, #tpu.memory_space<vmem>>, vector<1x4x256xf32>
    %208 = vector.shape_cast %207 : vector<1x4x256xf32> to vector<4x256xf32>
    %209 = vector.shape_cast %206 : vector<4x256xf32> to vector<1x4x256xf32>
    tpu.vector_store %arg6[%c0_70, %c0_71, %c0_72], %209 {strides = array<i32>} : memref<1x4x256xf32, #tpu.memory_space<vmem>>, vector<1x4x256xf32>,
    return
  }
  func.func @transform_0(%arg0: i32) -> (i32, i32, i32) {
    %c0_i32 = arith.constant 0 : i32
    %c0_i32_0 = arith.constant 0 : i32
    %c0_i32_1 = arith.constant 0 : i32
    return %arg0, %c0_i32, %c0_i32_0 : i32, i32, i32
  }
  func.func @transform_1(%arg0: i32) -> (i32, i32) {
    %c0_i32 = arith.constant 0 : i32
    %c0_i32_0 = arith.constant 0 : i32
    %c0_i32_1 = arith.constant 0 : i32
    return %c0_i32, %c0_i32_0 : i32, i32
  }
  func.func @transform_2(%arg0: i32) -> (i32, i32) {
    %c0_i32 = arith.constant 0 : i32
    %c0_i32_0 = arith.constant 0 : i32
    %c0_i32_1 = arith.constant 0 : i32
    return %c0_i32, %c0_i32_0 : i32, i32
  }
  func.func @transform_3(%arg0: i32) -> (i32, i32) {
    %c0_i32 = arith.constant 0 : i32
    %c0_i32_0 = arith.constant 0 : i32
    %c0_i32_1 = arith.constant 0 : i32
    return %c0_i32, %c0_i32_0 : i32, i32
  }
  func.func @transform_4(%arg0: i32) -> (i32, i32) {
    %c0_i32 = arith.constant 0 : i32
    %c0_i32_0 = arith.constant 0 : i32
    %c0_i32_1 = arith.constant 0 : i32
    return %c0_i32, %c0_i32_0 : i32, i32
  }
  func.func @transform_5(%arg0: i32) -> (i32, i32, i32) {
    %c0_i32 = arith.constant 0 : i32
    %c0_i32_0 = arith.constant 0 : i32
    %c0_i32_1 = arith.constant 0 : i32
    return %arg0, %c0_i32, %c0_i32_0 : i32, i32, i32
  }
}

</mosaic_0001>

<llo_original>
// kernel: tpu_custom_call.1
$region0: #{tpu_custom_call.1}
  #allocation0 [shape = 'u32[]', space=smem, size = 0x4, offset = 0x4, fixed_abs, tag = 'smem constant byte address 0x4 - core index']
  #allocation1 [shape = 'u32[72,128]{1,0:T(1,128)}', space=vmem, size = 0x9000, scoped, tag = 'internal scratch']
  %s0 = inlined_call_operand.hbm [shape: f32[2,4,256], index: 0, kind: input, shape index: {}]
  %s1 = inlined_call_operand.vmem [shape: bf16[2,4], index: 1, kind: input, shape index: {}]
  %s2 = inlined_call_operand.vmem [shape: f32[2,1], index: 2, kind: input, shape index: {}]
  %s3 = inlined_call_operand.vmem [shape: bf16[4,18], index: 3, kind: input, shape index: {}]
  %s4 = inlined_call_operand.vmem [shape: f32[4,1], index: 4, kind: input, shape index: {}]
  %s5 = inlined_call_operand.hbm [shape: f32[2,4,256], index: 5, kind: output, shape index: {}]
  %s6 = sld [smem:[#allocation0]]
  $region57: #{tpu_custom_call.1} parent=0
    _
  %s8 = ssub.s32 1, %s6
  %s9 = scalar_select 0, %s8, %s6
  $region1: #{tpu_custom_call.1} parent=0
    #allocation2 [shape = 'u8[8192]{0}', space=vmem, size = 0x2000, scoped, tag = 'input window, operand 0']
    #allocation3 [shape = 's32[2]{0}', space=sflag, size = 0x8, scoped, tag = 'scoped memory for tpu_custom_call.1']
    #allocation4 [shape = 's32[2]{0}', space=sflag, size = 0x8, scoped, tag = 'scoped memory for tpu_custom_call.1']
    #allocation5 [shape = 'u8[8192]{0}', space=vmem, size = 0x2000, scoped, tag = 'output window, operand 0']
    %10 = vsyncpa [#allocation3], 0
    %s11 = scalar_lea.sflag [#allocation3], 1
    %12 = vsyncpa %s11, 0
    %13 = vsyncpa [#allocation4], 0
    %s14 = scalar_lea.sflag [#allocation4], 1
    %15 = vsyncpa %s14, 0
    loop: start=0, step=1, limit=4
    $region2: #{tpu_custom_call.1} parent=1 // loop_pre_header
      _
    $region3: #{tpu_custom_call.1} parent=1 // loop_header
      %s17 = sphi 0, %s21
      %p18 = scmp.ge.s32.totalorder %s17, 4
      %s27 = sphi 0, %s29
      %s30 = sphi 0, %s27
      %s31 = sphi 0, %s30
      %s47 = sphi 0, %s31
      %s51 = sphi 0, %s51
      %s53 = sphi 0, %s51
      %s54 = sphi 0, %s53
      %s68 = sphi 0, %s54
      %s72 = sphi 0, %s72
      %s74 = sphi 0, %s72
      %s75 = sphi 0, %s74
      %s89 = sphi 0, %s75
      %s93 = sphi 0, %s93
      %s95 = sphi 0, %s93
      %s96 = sphi 0, %s95
      %s110 = sphi 0, %s96
      %s114 = sphi 0, %s114
      %s116 = sphi 0, %s114
      %s117 = sphi 0, %s116
      %s131 = sphi 0, %s117
      %s137 = sphi 0, %s139
      %s140 = sphi 0, %s137
      %s141 = sphi 0, %s140
      %s157 = sphi 0, %s141
    $region4: #{tpu_custom_call.1} parent=1 // loop_header_branch
      %20 = sbr.rel (%p18) target = $region8
    $region5: #{tpu_custom_call.1} parent=1 // loop_body
      %s22 = ssub.s32 %s17, 1
      %s23 = ssub.s32 %s17, 2
      %s24 = sadd.s32 %s17, 1
      %s25 = ssub.s32 %s17, %s24
      %p26 = scmp.eq.s32.totalorder %s25, 0
      %s28 = sadd.s32 %s27, 1
      %s29 = scalar_select %p26, %s27, %s28
      %p32 = pneg %p26
      %p33 = scmp.eq.s32.totalorder %s17, 1
      %p34 = por %p32, %p33
      %p35 = scmp.ne.s32.totalorder %s27, %s30
      %p36 = scmp.eq.s32.totalorder %s17, 0
      %p37 = por %p35, %p36
      %p38 = scmp.ne.s32.totalorder %s27, %s30
      %p39 = scmp.eq.s32.totalorder %s22, 1
      %p40 = por %p38, %p39
      %p41 = scmp.ne.s32.totalorder %s30, %s31
      %p42 = scmp.eq.s32.totalorder %s22, 0
      %p43 = por %p41, %p42
      %p44 = scmp.ne.s32.totalorder %s30, %s31
      %p45 = scmp.eq.s32.totalorder %s23, 1
      %p46 = por %p44, %p45
      %p48 = scmp.ne.s32.totalorder %s31, %s47
      %p49 = scmp.eq.s32.totalorder %s23, 0
      %p50 = por %p48, %p49
      %s52 = sadd.s32 %s51, 1
      %p55 = scmp.eq.s32.totalorder %s17, 1
      %p56 = scmp.ne.s32.totalorder %s51, %s53
      %p57 = scmp.eq.s32.totalorder %s17, 0
      %p58 = por %p56, %p57
      %p59 = scmp.ne.s32.totalorder %s51, %s53
      %p60 = scmp.eq.s32.totalorder %s22, 1
      %p61 = por %p59, %p60
      %p62 = scmp.ne.s32.totalorder %s53, %s54
      %p63 = scmp.eq.s32.totalorder %s22, 0
      %p64 = por %p62, %p63
      %p65 = scmp.ne.s32.totalorder %s53, %s54
      %p66 = scmp.eq.s32.totalorder %s23, 1
      %p67 = por %p65, %p66
      %p69 = scmp.ne.s32.totalorder %s54, %s68
      %p70 = scmp.eq.s32.totalorder %s23, 0
      %p71 = por %p69, %p70
      %s73 = sadd.s32 %s72, 1
      %p76 = scmp.eq.s32.totalorder %s17, 1
      %p77 = scmp.ne.s32.totalorder %s72, %s74
      %p78 = scmp.eq.s32.totalorder %s17, 0
      %p79 = por %p77, %p78
      %p80 = scmp.ne.s32.totalorder %s72, %s74
      %p81 = scmp.eq.s32.totalorder %s22, 1
      %p82 = por %p80, %p81
      %p83 = scmp.ne.s32.totalorder %s74, %s75
      %p84 = scmp.eq.s32.totalorder %s22, 0
      %p85 = por %p83, %p84
      %p86 = scmp.ne.s32.totalorder %s74, %s75
      %p87 = scmp.eq.s32.totalorder %s23, 1
      %p88 = por %p86, %p87
      %p90 = scmp.ne.s32.totalorder %s75, %s89
      %p91 = scmp.eq.s32.totalorder %s23, 0
      %p92 = por %p90, %p91
      %s94 = sadd.s32 %s93, 1
      %p97 = scmp.eq.s32.totalorder %s17, 1
      %p98 = scmp.ne.s32.totalorder %s93, %s95
      %p99 = scmp.eq.s32.totalorder %s17, 0
      %p100 = por %p98, %p99
      %p101 = scmp.ne.s32.totalorder %s93, %s95
      %p102 = scmp.eq.s32.totalorder %s22, 1
      %p103 = por %p101, %p102
      %p104 = scmp.ne.s32.totalorder %s95, %s96
      %p105 = scmp.eq.s32.totalorder %s22, 0
      %p106 = por %p104, %p105
      %p107 = scmp.ne.s32.totalorder %s95, %s96
      %p108 = scmp.eq.s32.totalorder %s23, 1
      %p109 = por %p107, %p108
      %p111 = scmp.ne.s32.totalorder %s96, %s110
      %p112 = scmp.eq.s32.totalorder %s23, 0
      %p113 = por %p111, %p112
      %s115 = sadd.s32 %s114, 1
      %p118 = scmp.eq.s32.totalorder %s17, 1
      %p119 = scmp.ne.s32.totalorder %s114, %s116
      %p120 = scmp.eq.s32.totalorder %s17, 0
      %p121 = por %p119, %p120
      %p122 = scmp.ne.s32.totalorder %s114, %s116
      %p123 = scmp.eq.s32.totalorder %s22, 1
      %p124 = por %p122, %p123
      %p125 = scmp.ne.s32.totalorder %s116, %s117
      %p126 = scmp.eq.s32.totalorder %s22, 0
      %p127 = por %p125, %p126
      %p128 = scmp.ne.s32.totalorder %s116, %s117
      %p129 = scmp.eq.s32.totalorder %s23, 1
      %p130 = por %p128, %p129
      %p132 = scmp.ne.s32.totalorder %s117, %s131
      %p133 = scmp.eq.s32.totalorder %s23, 0
      %p134 = por %p132, %p133
      %s135 = ssub.s32 %s17, %s24
      %p136 = scmp.eq.s32.totalorder %s135, 0
      %s138 = sadd.s32 %s137, 1
      %s139 = scalar_select %p136, %s137, %s138
      %p142 = pneg %p136
      %p143 = scmp.eq.s32.totalorder %s17, 1
      %p144 = por %p142, %p143
      %p145 = scmp.ne.s32.totalorder %s137, %s140
      %p146 = scmp.eq.s32.totalorder %s17, 0
      %p147 = por %p145, %p146
      %p148 = scmp.ne.s32.totalorder %s137, %s140
      %p149 = scmp.eq.s32.totalorder %s22, 1
      %p150 = por %p148, %p149
      %p151 = scmp.ne.s32.totalorder %s140, %s141
      %p152 = scmp.eq.s32.totalorder %s22, 0
      %p153 = por %p151, %p152
      %p154 = scmp.ne.s32.totalorder %s140, %s141
      %p155 = scmp.eq.s32.totalorder %s23, 1
      %p156 = por %p154, %p155
      %p158 = scmp.ne.s32.totalorder %s141, %s157
      %p159 = scmp.eq.s32.totalorder %s23, 0
      %p160 = por %p158, %p159
      %p161 = scmp.le.s32.totalorder 1, %s17
      %p162 = scmp.lt.s32.totalorder %s17, 3
      %p163 = pnand %p161, %p162
      %p164 = pneg %p163
      // Predicated region
      $region9: #{tpu_custom_call.1} parent=5 // pred_check
        _
      $region10: #{tpu_custom_call.1} parent=5 // pred_check_branch
        %166 = sbr.rel (%p163) target = $region12
      $region11: #{tpu_custom_call.1} parent=5 // pred_region
        %s167 = ssub.s32 %s17, 1
        // Predicated region
        $region13: #{tpu_custom_call.1} parent=11 // pred_check
          %p168 = pneg %p64
        $region14: #{tpu_custom_call.1} parent=11 // pred_check_branch
          %170 = sbr.rel (%p168) target = $region16
        $region15: #{tpu_custom_call.1} parent=11 // pred_region
          _
        $region16: #{tpu_custom_call.1} parent=11 // pred_fallthru
          _
        // Predicated region
        $region17: #{tpu_custom_call.1} parent=11 // pred_check
          %p171 = pneg %p85
        $region18: #{tpu_custom_call.1} parent=11 // pred_check_branch
          %173 = sbr.rel (%p171) target = $region20
        $region19: #{tpu_custom_call.1} parent=11 // pred_region
          _
        $region20: #{tpu_custom_call.1} parent=11 // pred_fallthru
          _
        // Predicated region
        $region21: #{tpu_custom_call.1} parent=11 // pred_check
          %p174 = pneg %p106
        $region22: #{tpu_custom_call.1} parent=11 // pred_check_branch
          %176 = sbr.rel (%p174) target = $region24
        $region23: #{tpu_custom_call.1} parent=11 // pred_region
          _
        $region24: #{tpu_custom_call.1} parent=11 // pred_fallthru
          _
        // Predicated region
        $region25: #{tpu_custom_call.1} parent=11 // pred_check
          %p177 = pneg %p127
        $region26: #{tpu_custom_call.1} parent=11 // pred_check_branch
          %179 = sbr.rel (%p177) target = $region28
        $region27: #{tpu_custom_call.1} parent=11 // pred_region
          _
        $region28: #{tpu_custom_call.1} parent=11 // pred_fallthru
          _
      $region12: #{tpu_custom_call.1} parent=5 // pred_fallthru
        _
      %p180 = scmp.lt.s32.totalorder %s17, 2
      // Predicated region
      $region29: #{tpu_custom_call.1} parent=5 // pred_check
        %p181 = pneg %p180
      $region30: #{tpu_custom_call.1} parent=5 // pred_check_branch
        %183 = sbr.rel (%p181) target = $region32
      $region31: #{tpu_custom_call.1} parent=5 // pred_region
        // Predicated region
        $region33: #{tpu_custom_call.1} parent=31 // pred_check
          %p184 = pneg %p37
        $region34: #{tpu_custom_call.1} parent=31 // pred_check_branch
          %186 = sbr.rel (%p184) target = $region36
        $region35: #{tpu_custom_call.1} parent=31 // pred_region
          %s187 = sand.u32 %s27, 1
          %s188 = scalar_lea.sflag [#allocation3], %s187
          %s189 = sand.u32 %s27, 1
          %s190 = smul.addr %s189, 8
          %s191 = scalar_lea.vmem [#allocation2], %s190
          %193 = vsyncadd %s188, 0
          %s194 = smul.addr %s17, 2
          %s195 = smul.addr %s194, 4
          %s196 = scalar_lea.hbm %s0, %s195
          %s198 = sshll.u32 %s196, 4
          %s199 = int_to_ptr.hbm [resolvable:$true] %s198
          %s200 = sshll.u32 %s191, 4
          %s201 = int_to_ptr.vmem [resolvable:$true] %s200
          %203 = dma.hbm_to_vmem [thread:$0]  %s199, 128, %s201, %s188
        $region36: #{tpu_custom_call.1} parent=31 // pred_fallthru
          _
      $region32: #{tpu_custom_call.1} parent=5 // pred_fallthru
        _
      %p204 = scmp.le.s32.totalorder 1, %s17
      %p205 = scmp.lt.s32.totalorder %s17, 3
      %p206 = pnand %p204, %p205
      %p207 = pneg %p206
      // Predicated region
      $region37: #{tpu_custom_call.1} parent=5 // pred_check
        _
      $region38: #{tpu_custom_call.1} parent=5 // pred_check_branch
        %209 = sbr.rel (%p206) target = $region40
      $region39: #{tpu_custom_call.1} parent=5 // pred_region
        %s210 = ssub.s32 %s17, 1
        %s211 = sand.u32 %s30, 1
        %s212 = scalar_lea.sflag [#allocation3], %s211
        %s213 = sand.u32 %s30, 1
        %s214 = smul.addr %s213, 8
        %s215 = scalar_lea.vmem [#allocation2], %s214
        // Predicated region
        $region41: #{tpu_custom_call.1} parent=39 // pred_check
          %p216 = pneg %p43
        $region42: #{tpu_custom_call.1} parent=39 // pred_check_branch
          %218 = sbr.rel (%p216) target = $region44
        $region43: #{tpu_custom_call.1} parent=39 // pred_region
          %220 = dma.done %s212, 128
        $region44: #{tpu_custom_call.1} parent=39 // pred_fallthru
          _
        %s221 = sand.u32 %s30, 1
        %s222 = scalar_lea.sflag [#allocation3], %s221
        %s223 = sand.u32 %s30, 1
        %s224 = smul.addr %s223, 8
        %s225 = scalar_lea.vmem [#allocation2], %s224
        %p226 = pneg %p43
        %p227 = pneg %p40
        %p228 = pneg %p64
        %p229 = pneg %p61
        %p230 = pneg %p85
        %p231 = pneg %p82
        %p232 = pneg %p106
        %p233 = pneg %p103
        %p234 = pneg %p127
        %p235 = pneg %p124
        %p236 = pneg %p153
        %p237 = pneg %p150
        %s238 = sand.u32 %s140, 1
        %s239 = scalar_lea.sflag [#allocation4], %s238
        %s240 = sand.u32 %s140, 1
        %s241 = smul.addr %s240, 8
        %s242 = scalar_lea.vmem [#allocation5], %s241
        %v244 = vld [vmem:[%s215] sm:$0xff]
        %v245 = vld [vmem:[%s1] sm:$0x1]
        %247 = vst [vmem:[#allocation1] ss:$2 sm:$0xff] %v244
        %v248 = vld.sshfl [vmem:[#allocation1] sm:$0xff pattern:$0x75316420]
        %v249 = vld.sshfl [vmem:[#allocation1 + $0x8] sm:$0xff pattern:$0x75316420]
        %v252 = vpack.c.bf16 %v248, %v248
        %v253 = vpack.c.bf16 %v249, %v249
        %v254 = vld [vmem:[%s2] sm:$0x3]
        %256 = vset.pattern.permute.xlu0 0
        %257 = vperm.xlu0 %256, %v254
        %v258 = vpop.permute.xlu0 %257
        %vm260 = vcmask 31744
        %v262 = vsel %vm260, %v245, 0
        %vm264 = vcmask 1041408
        %v266 = vsel %vm264, %v252, 0
        %v269 = vsel %vm264, %v253, 0
        %271 = vmatpush.bf16.msra.mxu0 0
        %272 = vmatpush.bf16.msra.mxu0 0
        %273 = vmatpush.bf16.msra.mxu0 0
        %274 = vmatpush.bf16.msra.mxu0 0
        %275 = vmatpush.bf16.msra.mxu0 0
        %276 = vmatpush.bf16.msra.mxu0 0
        %277 = vmatpush.bf16.msra.mxu0 0
        %278 = vmatpush.bf16.msra.mxu0 %v266
        %279 = vmatmul.bf16.gmra.mxu0 %v262
        %v280 = vpop.f32.mrf.mxu0
        %v281 = vadd.f32 %v258, %v280
        %v282 = vpop.f32.mrf.mxu0
        %283 = vdwg.mxu0
        %284 = vmatpush.bf16.msra.mxu0 0
        %285 = vmatpush.bf16.msra.mxu0 0
        %286 = vmatpush.bf16.msra.mxu0 0
        %287 = vmatpush.bf16.msra.mxu0 0
        %288 = vmatpush.bf16.msra.mxu0 0
        %289 = vmatpush.bf16.msra.mxu0 0
        %290 = vmatpush.bf16.msra.mxu0 0
        %291 = vmatpush.bf16.msra.mxu0 %v269
        %292 = vmatmul.bf16.gmra.mxu0 %v262
        %v293 = vpop.f32.mrf.mxu0
        %v294 = vadd.f32 %v258, %v293
        %v295 = vpop.f32.mrf.mxu0
        %296 = vdwg.mxu0
        %vm297 = vcmp.ge.f32.partialorder %v281, 0.0
        %vm298 = vcmp.ge.f32.partialorder %v294, 0.0
        %v299 = vmul.f32 %v281, 0.1
        %v300 = vmul.f32 %v294, 0.1
        %v301 = vsel %vm297, %v281, %v299
        %v302 = vsel %vm298, %v294, %v300
        %v303 = vlaneseq
        %v304 = vand.u32 %v303, 127
        %v305 = vadd.s32 %v304, 128
        %vm306 = vcmp.lt.s32.totalorder %v304, 0
        %v307 = vsub.s32 0, %v304
        %v308 = vsel %vm306, %v307, %v304
        %v309 = vshrl.u32 %v308, 4
        %v310 = vand.u32 %v308, 15
        %v311 = vsub.s32 0, %v310
        %v312 = vsel %vm306, %v311, %v310
        %vm313 = vcmp.lt.s32.totalorder %v305, 0
        %v314 = vsub.s32 0, %v305
        %v315 = vsel %vm313, %v314, %v305
        %v316 = vshrl.u32 %v315, 4
        %v317 = vand.u32 %v315, 15
        %v318 = vsub.s32 0, %v317
        %v319 = vsel %vm313, %v318, %v317
        %vm320 = vcmp.ne.s32.totalorder %v312, 0
        %vm321 = vcmp.ne.s32.totalorder %v319, 0
        %vm322 = vcmp.lt.s32.totalorder %v312, 0
        %vm323 = vcmp.lt.s32.totalorder %v319, 0
        %vm324 = vmand %vm322, %vm320
        %vm325 = vmand %vm323, %vm321
        %v326 = vadd.s32 %v312, 16
        %v327 = vadd.s32 %v319, 16
        %v328 = vsel %vm324, %v326, %v312
        %v329 = vsel %vm325, %v327, %v319
        %330 = vrot.lane.b32.xlu0 %v301, 17
        %v331 = vpop.permute.xlu0 %330
        %332 = vrot.lane.b32.xlu0 %v302, 17
        %v333 = vpop.permute.xlu0 %332
        %vm334 = vcmp.lt.s32.totalorder %v304, 17
        %v335 = vsel %vm334, %v331, %v333
        %v336 = vsel %vm334, %v333, %v331
        %v337 = vadd.s32 %v304, 4294967279
        %v338 = vadd.s32 %v305, 4294967279
        %vm339 = vcmp.ge.s32.totalorder %v337, 0
        %vm340 = vcmp.ge.s32.totalorder %v338, 0
        %vm341 = vcmp.lt.s32.totalorder %v337, 256
        %vm342 = vcmp.lt.s32.totalorder %v338, 256
        %vm343 = vmand %vm339, %vm341
        %vm344 = vmand %vm340, %vm342
        %vm345 = vcmp.ge.s32.totalorder %v328, 1
        %vm346 = vcmp.ge.s32.totalorder %v329, 1
        %vm347 = vmand %vm343, %vm345
        %vm348 = vmand %vm344, %vm346
        %v349 = vsel %vm347, 1, 0
        %v350 = vsel %vm348, 1, 0
        %vm351 = vcmp.eq.s32.totalorder %v349, 1
        %vm352 = vcmp.eq.s32.totalorder %v350, 1
        %v353 = vsel %vm351, %v336, 0.0
        %v354 = vsel %vm352, %v335, 0.0
        %355 = vrot.lane.b32.xlu0 %v301, 16
        %v356 = vpop.permute.xlu0 %355
        %357 = vrot.lane.b32.xlu0 %v302, 16
        %v358 = vpop.permute.xlu0 %357
        %vm359 = vcmp.lt.s32.totalorder %v304, 16
        %v360 = vsel %vm359, %v356, %v358
        %v361 = vsel %vm359, %v358, %v356
        %v362 = vadd.s32 %v304, 4294967280
        %v363 = vadd.s32 %v305, 4294967280
        %vm364 = vcmp.ge.s32.totalorder %v362, 0
        %vm365 = vcmp.ge.s32.totalorder %v363, 0
        %vm366 = vcmp.lt.s32.totalorder %v362, 256
        %vm367 = vcmp.lt.s32.totalorder %v363, 256
        %vm368 = vmand %vm364, %vm366
        %vm369 = vmand %vm365, %vm367
        %v370 = vsel %vm368, 1, 0
        %v371 = vsel %vm369, 1, 0
        %vm372 = vcmp.eq.s32.totalorder %v370, 1
        %vm373 = vcmp.eq.s32.totalorder %v371, 1
        %v374 = vsel %vm372, %v361, 0.0
        %v375 = vsel %vm373, %v360, 0.0
        %376 = vrot.lane.b32.xlu0 %v301, 15
        %v377 = vpop.permute.xlu0 %376
        %378 = vrot.lane.b32.xlu0 %v302, 15
        %v379 = vpop.permute.xlu0 %378
        %vm380 = vcmp.lt.s32.totalorder %v304, 15
        %v381 = vsel %vm380, %v377, %v379
        %v382 = vsel %vm380, %v379, %v377
        %v383 = vadd.s32 %v304, 4294967281
        %v384 = vadd.s32 %v305, 4294967281
        %vm385 = vcmp.ge.s32.totalorder %v383, 0
        %vm386 = vcmp.ge.s32.totalorder %v384, 0
        %vm387 = vcmp.lt.s32.totalorder %v383, 256
        %vm388 = vcmp.lt.s32.totalorder %v384, 256
        %vm389 = vmand %vm385, %vm387
        %vm390 = vmand %vm386, %vm388
        %vm391 = vcmp.lt.s32.totalorder %v328, 15
        %vm392 = vcmp.lt.s32.totalorder %v329, 15
        %vm393 = vmand %vm389, %vm391
        %vm394 = vmand %vm390, %vm392
        %v395 = vsel %vm393, 1, 0
        %v396 = vsel %vm394, 1, 0
        %vm397 = vcmp.eq.s32.totalorder %v395, 1
        %vm398 = vcmp.eq.s32.totalorder %v396, 1
        %v399 = vsel %vm397, %v382, 0.0
        %v400 = vsel %vm398, %v381, 0.0
        %401 = vrot.lane.b32.xlu0 %v301, 1
        %v402 = vpop.permute.xlu0 %401
        %403 = vrot.lane.b32.xlu0 %v302, 1
        %v404 = vpop.permute.xlu0 %403
        %vm405 = vcmp.lt.s32.totalorder %v304, 1
        %v406 = vsel %vm405, %v402, %v404
        %v407 = vsel %vm405, %v404, %v402
        %v408 = vadd.s32 %v304, 4294967295
        %v409 = vadd.s32 %v305, 4294967295
        %vm410 = vcmp.ge.s32.totalorder %v408, 0
        %vm411 = vcmp.ge.s32.totalorder %v409, 0
        %vm412 = vcmp.lt.s32.totalorder %v408, 256
        %vm413 = vcmp.lt.s32.totalorder %v409, 256
        %vm414 = vmand %vm410, %vm412
        %vm415 = vmand %vm411, %vm413
        %vm416 = vmand %vm414, %vm345
        %vm417 = vmand %vm415, %vm346
        %v418 = vsel %vm416, 1, 0
        %v419 = vsel %vm417, 1, 0
        %vm420 = vcmp.eq.s32.totalorder %v418, 1
        %vm421 = vcmp.eq.s32.totalorder %v419, 1
        %v422 = vsel %vm420, %v407, 0.0
        %v423 = vsel %vm421, %v406, 0.0
        %424 = vrot.lane.b32.xlu0 %v301, 127
        %v425 = vpop.permute.xlu0 %424
        %426 = vrot.lane.b32.xlu0 %v302, 127
        %v427 = vpop.permute.xlu0 %426
        %vm428 = vcmp.lt.s32.totalorder %v304, 127
        %v429 = vsel %vm428, %v425, %v427
        %v430 = vsel %vm428, %v427, %v425
        %v431 = vadd.s32 %v304, 1
        %v432 = vadd.s32 %v305, 1
        %vm433 = vcmp.ge.s32.totalorder %v431, 0
        %vm434 = vcmp.ge.s32.totalorder %v432, 0
        %vm435 = vcmp.lt.s32.totalorder %v431, 256
        %vm436 = vcmp.lt.s32.totalorder %v432, 256
        %vm437 = vmand %vm433, %vm435
        %vm438 = vmand %vm434, %vm436
        %vm439 = vmand %vm437, %vm391
        %vm440 = vmand %vm438, %vm392
        %v441 = vsel %vm439, 1, 0
        %v442 = vsel %vm440, 1, 0
        %vm443 = vcmp.eq.s32.totalorder %v441, 1
        %vm444 = vcmp.eq.s32.totalorder %v442, 1
        %v445 = vsel %vm443, %v429, 0.0
        %v446 = vsel %vm444, %v430, 0.0
        %447 = vrot.lane.b32.xlu0 %v301, 113
        %v448 = vpop.permute.xlu0 %447
        %449 = vrot.lane.b32.xlu0 %v302, 113
        %v450 = vpop.permute.xlu0 %449
        %vm451 = vcmp.lt.s32.totalorder %v304, 113
        %v452 = vsel %vm451, %v448, %v450
        %v453 = vsel %vm451, %v450, %v448
        %v454 = vadd.s32 %v304, 15
        %v455 = vadd.s32 %v305, 15
        %vm456 = vcmp.ge.s32.totalorder %v454, 0
        %vm457 = vcmp.ge.s32.totalorder %v455, 0
        %vm458 = vcmp.lt.s32.totalorder %v454, 256
        %vm459 = vcmp.lt.s32.totalorder %v455, 256
        %vm460 = vmand %vm456, %vm458
        %vm461 = vmand %vm457, %vm459
        %vm462 = vmand %vm460, %vm345
        %vm463 = vmand %vm461, %vm346
        %v464 = vsel %vm462, 1, 0
        %v465 = vsel %vm463, 1, 0
        %vm466 = vcmp.eq.s32.totalorder %v464, 1
        %vm467 = vcmp.eq.s32.totalorder %v465, 1
        %v468 = vsel %vm466, %v452, 0.0
        %v469 = vsel %vm467, %v453, 0.0
        %470 = vrot.lane.b32.xlu0 %v301, 112
        %v471 = vpop.permute.xlu0 %470
        %472 = vrot.lane.b32.xlu0 %v302, 112
        %v473 = vpop.permute.xlu0 %472
        %vm474 = vcmp.lt.s32.totalorder %v304, 112
        %v475 = vsel %vm474, %v471, %v473
        %v476 = vsel %vm474, %v473, %v471
        %v477 = vadd.s32 %v304, 16
        %v478 = vadd.s32 %v305, 16
        %vm479 = vcmp.ge.s32.totalorder %v477, 0
        %vm480 = vcmp.ge.s32.totalorder %v478, 0
        %vm481 = vcmp.lt.s32.totalorder %v477, 256
        %vm482 = vcmp.lt.s32.totalorder %v478, 256
        %vm483 = vmand %vm479, %vm481
        %vm484 = vmand %vm480, %vm482
        %v485 = vsel %vm483, 1, 0
        %v486 = vsel %vm484, 1, 0
        %vm487 = vcmp.eq.s32.totalorder %v485, 1
        %vm488 = vcmp.eq.s32.totalorder %v486, 1
        %v489 = vsel %vm487, %v475, 0.0
        %v490 = vsel %vm488, %v476, 0.0
        %491 = vrot.lane.b32.xlu0 %v301, 111
        %v492 = vpop.permute.xlu0 %491
        %493 = vrot.lane.b32.xlu0 %v302, 111
        %v494 = vpop.permute.xlu0 %493
        %vm495 = vcmp.lt.s32.totalorder %v304, 111
        %v496 = vsel %vm495, %v492, %v494
        %v497 = vsel %vm495, %v494, %v492
        %v498 = vadd.s32 %v304, 17
        %v499 = vadd.s32 %v305, 17
        %vm500 = vcmp.ge.s32.totalorder %v498, 0
        %vm501 = vcmp.ge.s32.totalorder %v499, 0
        %vm502 = vcmp.lt.s32.totalorder %v498, 256
        %vm503 = vcmp.lt.s32.totalorder %v499, 256
        %vm504 = vmand %vm500, %vm502
        %vm505 = vmand %vm501, %vm503
        %vm506 = vmand %vm504, %vm391
        %vm507 = vmand %vm505, %vm392
        %v508 = vsel %vm506, 1, 0
        %v509 = vsel %vm507, 1, 0
        %vm510 = vcmp.eq.s32.totalorder %v508, 1
        %vm511 = vcmp.eq.s32.totalorder %v509, 1
        %v512 = vsel %vm510, %v496, 0.0
        %v513 = vsel %vm511, %v497, 0.0
        %v514 = vld [vmem:[%s3] sm:$0x3]
        %v515 = vpack.c.bf16 %v353, %v353
        %v516 = vpack.c.bf16 %v354, %v354
        %v517 = vpack.c.bf16 %v374, %v374
        %v518 = vpack.c.bf16 %v375, %v375
        %520 = vst [vmem:[#allocation1] ss:$4 sm:$0xff] %v514
        %v521 = vld.sshfl [vmem:[#allocation1] sm:$0xff pattern:$0x73625140]
        %523 = vrot.lane.b32.xlu0 %v521, 126
        %v524 = vpop.permute.xlu0 %523
        %vm525 = vcmask 15360
        %v527 = vsel %vm525, %v524, 0
        %vm529 = vcmask 1040384
        %v531 = vsel %vm529, %v517, 0
        %v534 = vsel %vm529, %v518, 0
        %536 = vmatpush.bf16.msra.mxu0 0
        %537 = vmatpush.bf16.msra.mxu0 0
        %538 = vmatpush.bf16.msra.mxu0 0
        %539 = vmatpush.bf16.msra.mxu0 0
        %540 = vmatpush.bf16.msra.mxu0 0
        %541 = vmatpush.bf16.msra.mxu0 0
        %542 = vmatpush.bf16.msra.mxu0 0
        %543 = vmatpush.bf16.msra.mxu0 %v531
        %544 = vmatmul.bf16.gmra.mxu0 %v527
        %v545 = vpop.f32.mrf.mxu0
        %v546 = vadd.f32 0.0, %v545
        %v547 = vpop.f32.mrf.mxu0
        %548 = vdwg.mxu0
        %549 = vmatpush.bf16.msra.mxu0 0
        %550 = vmatpush.bf16.msra.mxu0 0
        %551 = vmatpush.bf16.msra.mxu0 0
        %552 = vmatpush.bf16.msra.mxu0 0
        %553 = vmatpush.bf16.msra.mxu0 0
        %554 = vmatpush.bf16.msra.mxu0 0
        %555 = vmatpush.bf16.msra.mxu0 0
        %556 = vmatpush.bf16.msra.mxu0 %v534
        %557 = vmatmul.bf16.gmra.mxu0 %v527
        %v558 = vpop.f32.mrf.mxu0
        %v559 = vadd.f32 0.0, %v558
        %v560 = vpop.f32.mrf.mxu0
        %561 = vdwg.mxu0
        %v562 = vsel %vm525, %v514, 0
        %v565 = vsel %vm529, %v515, 0
        %v568 = vsel %vm529, %v516, 0
        %570 = vmatpush.bf16.msra.mxu0 0
        %571 = vmatpush.bf16.msra.mxu0 0
        %572 = vmatpush.bf16.msra.mxu0 0
        %573 = vmatpush.bf16.msra.mxu0 0
        %574 = vmatpush.bf16.msra.mxu0 0
        %575 = vmatpush.bf16.msra.mxu0 0
        %576 = vmatpush.bf16.msra.mxu0 0
        %577 = vmatpush.bf16.msra.mxu0 %v565
        %578 = vmatmul.bf16.gmra.mxu0 %v562
        %v579 = vpop.f32.mrf.mxu0
        %v580 = vadd.f32 %v546, %v579
        %v581 = vpop.f32.mrf.mxu0
        %582 = vdwg.mxu0
        %583 = vmatpush.bf16.msra.mxu0 0
        %584 = vmatpush.bf16.msra.mxu0 0
        %585 = vmatpush.bf16.msra.mxu0 0
        %586 = vmatpush.bf16.msra.mxu0 0
        %587 = vmatpush.bf16.msra.mxu0 0
        %588 = vmatpush.bf16.msra.mxu0 0
        %589 = vmatpush.bf16.msra.mxu0 0
        %590 = vmatpush.bf16.msra.mxu0 %v568
        %591 = vmatmul.bf16.gmra.mxu0 %v562
        %v592 = vpop.f32.mrf.mxu0
        %v593 = vadd.f32 %v559, %v592
        %v594 = vpop.f32.mrf.mxu0
        %595 = vdwg.mxu0
        %v596 = vpack.c.bf16 %v399, %v399
        %v597 = vpack.c.bf16 %v400, %v400
        %598 = vst [vmem:[#allocation1] ss:$4 sm:$0xff] %v514
        %v599 = vld.sshfl [vmem:[#allocation1] sm:$0xff pattern:$0x73625140]
        %601 = vrot.lane.b32.xlu0 %v599, 124
        %v602 = vpop.permute.xlu0 %601
        %v604 = vsel %vm525, %v602, 0
        %v607 = vsel %vm529, %v596, 0
        %v610 = vsel %vm529, %v597, 0
        %612 = vmatpush.bf16.msra.mxu0 0
        %613 = vmatpush.bf16.msra.mxu0 0
        %614 = vmatpush.bf16.msra.mxu0 0
        %615 = vmatpush.bf16.msra.mxu0 0
        %616 = vmatpush.bf16.msra.mxu0 0
        %617 = vmatpush.bf16.msra.mxu0 0
        %618 = vmatpush.bf16.msra.mxu0 0
        %619 = vmatpush.bf16.msra.mxu0 %v607
        %620 = vmatmul.bf16.gmra.mxu0 %v604
        %v621 = vpop.f32.mrf.mxu0
        %v622 = vadd.f32 0.0, %v621
        %v623 = vpop.f32.mrf.mxu0
        %624 = vdwg.mxu0
        %625 = vmatpush.bf16.msra.mxu0 0
        %626 = vmatpush.bf16.msra.mxu0 0
        %627 = vmatpush.bf16.msra.mxu0 0
        %628 = vmatpush.bf16.msra.mxu0 0
        %629 = vmatpush.bf16.msra.mxu0 0
        %630 = vmatpush.bf16.msra.mxu0 0
        %631 = vmatpush.bf16.msra.mxu0 0
        %632 = vmatpush.bf16.msra.mxu0 %v610
        %633 = vmatmul.bf16.gmra.mxu0 %v604
        %v634 = vpop.f32.mrf.mxu0
        %v635 = vadd.f32 0.0, %v634
        %v636 = vpop.f32.mrf.mxu0
        %637 = vdwg.mxu0
        %v638 = vadd.f32 %v580, %v622
        %v639 = vadd.f32 %v593, %v635
        %v640 = vpack.c.bf16 %v422, %v422
        %v641 = vpack.c.bf16 %v423, %v423
        %642 = vst [vmem:[#allocation1] ss:$4 sm:$0xff] %v514
        %v643 = vld.sshfl [vmem:[#allocation1] sm:$0xff pattern:$0x73625140]
        %645 = vrot.lane.b32.xlu0 %v643, 122
        %v646 = vpop.permute.xlu0 %645
        %v648 = vsel %vm525, %v646, 0
        %v651 = vsel %vm529, %v640, 0
        %v654 = vsel %vm529, %v641, 0
        %656 = vmatpush.bf16.msra.mxu0 0
        %657 = vmatpush.bf16.msra.mxu0 0
        %658 = vmatpush.bf16.msra.mxu0 0
        %659 = vmatpush.bf16.msra.mxu0 0
        %660 = vmatpush.bf16.msra.mxu0 0
        %661 = vmatpush.bf16.msra.mxu0 0
        %662 = vmatpush.bf16.msra.mxu0 0
        %663 = vmatpush.bf16.msra.mxu0 %v651
        %664 = vmatmul.bf16.gmra.mxu0 %v648
        %v665 = vpop.f32.mrf.mxu0
        %v666 = vadd.f32 0.0, %v665
        %v667 = vpop.f32.mrf.mxu0
        %668 = vdwg.mxu0
        %669 = vmatpush.bf16.msra.mxu0 0
        %670 = vmatpush.bf16.msra.mxu0 0
        %671 = vmatpush.bf16.msra.mxu0 0
        %672 = vmatpush.bf16.msra.mxu0 0
        %673 = vmatpush.bf16.msra.mxu0 0
        %674 = vmatpush.bf16.msra.mxu0 0
        %675 = vmatpush.bf16.msra.mxu0 0
        %676 = vmatpush.bf16.msra.mxu0 %v654
        %677 = vmatmul.bf16.gmra.mxu0 %v648
        %v678 = vpop.f32.mrf.mxu0
        %v679 = vadd.f32 0.0, %v678
        %v680 = vpop.f32.mrf.mxu0
        %681 = vdwg.mxu0
        %v682 = vadd.f32 %v638, %v666
        %v683 = vadd.f32 %v639, %v679
        %v684 = vpack.c.bf16 %v301, %v301
        %v685 = vpack.c.bf16 %v302, %v302
        %686 = vst [vmem:[#allocation1] ss:$4 sm:$0xff] %v514
        %v687 = vld.sshfl [vmem:[#allocation1] sm:$0xff pattern:$0x73625140]
        %689 = vrot.lane.b32.xlu0 %v687, 120
        %v690 = vpop.permute.xlu0 %689
        %v692 = vsel %vm525, %v690, 0
        %v695 = vsel %vm529, %v684, 0
        %v698 = vsel %vm529, %v685, 0
        %700 = vmatpush.bf16.msra.mxu0 0
        %701 = vmatpush.bf16.msra.mxu0 0
        %702 = vmatpush.bf16.msra.mxu0 0
        %703 = vmatpush.bf16.msra.mxu0 0
        %704 = vmatpush.bf16.msra.mxu0 0
        %705 = vmatpush.bf16.msra.mxu0 0
        %706 = vmatpush.bf16.msra.mxu0 0
        %707 = vmatpush.bf16.msra.mxu0 %v695
        %708 = vmatmul.bf16.gmra.mxu0 %v692
        %v709 = vpop.f32.mrf.mxu0
        %v710 = vadd.f32 0.0, %v709
        %v711 = vpop.f32.mrf.mxu0
        %712 = vdwg.mxu0
        %713 = vmatpush.bf16.msra.mxu0 0
        %714 = vmatpush.bf16.msra.mxu0 0
        %715 = vmatpush.bf16.msra.mxu0 0
        %716 = vmatpush.bf16.msra.mxu0 0
        %717 = vmatpush.bf16.msra.mxu0 0
        %718 = vmatpush.bf16.msra.mxu0 0
        %719 = vmatpush.bf16.msra.mxu0 0
        %720 = vmatpush.bf16.msra.mxu0 %v698
        %721 = vmatmul.bf16.gmra.mxu0 %v692
        %v722 = vpop.f32.mrf.mxu0
        %v723 = vadd.f32 0.0, %v722
        %v724 = vpop.f32.mrf.mxu0
        %725 = vdwg.mxu0
        %v726 = vadd.f32 %v682, %v710
        %v727 = vadd.f32 %v683, %v723
        %v728 = vpack.c.bf16 %v445, %v445
        %v729 = vpack.c.bf16 %v446, %v446
        %730 = vst [vmem:[#allocation1] ss:$4 sm:$0xff] %v514
        %v731 = vld.sshfl [vmem:[#allocation1] sm:$0xff pattern:$0x73625140]
        %733 = vrot.lane.b32.xlu0 %v731, 118
        %v734 = vpop.permute.xlu0 %733
        %v736 = vsel %vm525, %v734, 0
        %v739 = vsel %vm529, %v728, 0
        %v742 = vsel %vm529, %v729, 0
        %744 = vmatpush.bf16.msra.mxu0 0
        %745 = vmatpush.bf16.msra.mxu0 0
        %746 = vmatpush.bf16.msra.mxu0 0
        %747 = vmatpush.bf16.msra.mxu0 0
        %748 = vmatpush.bf16.msra.mxu0 0
        %749 = vmatpush.bf16.msra.mxu0 0
        %750 = vmatpush.bf16.msra.mxu0 0
        %751 = vmatpush.bf16.msra.mxu0 %v739
        %752 = vmatmul.bf16.gmra.mxu0 %v736
        %v753 = vpop.f32.mrf.mxu0
        %v754 = vadd.f32 0.0, %v753
        %v755 = vpop.f32.mrf.mxu0
        %756 = vdwg.mxu0
        %757 = vmatpush.bf16.msra.mxu0 0
        %758 = vmatpush.bf16.msra.mxu0 0
        %759 = vmatpush.bf16.msra.mxu0 0
        %760 = vmatpush.bf16.msra.mxu0 0
        %761 = vmatpush.bf16.msra.mxu0 0
        %762 = vmatpush.bf16.msra.mxu0 0
        %763 = vmatpush.bf16.msra.mxu0 0
        %764 = vmatpush.bf16.msra.mxu0 %v742
        %765 = vmatmul.bf16.gmra.mxu0 %v736
        %v766 = vpop.f32.mrf.mxu0
        %v767 = vadd.f32 0.0, %v766
        %v768 = vpop.f32.mrf.mxu0
        %769 = vdwg.mxu0
        %v770 = vadd.f32 %v726, %v754
        %v771 = vadd.f32 %v727, %v767
        %v772 = vpack.c.bf16 %v468, %v468
        %v773 = vpack.c.bf16 %v469, %v469
        %774 = vst [vmem:[#allocation1] ss:$4 sm:$0xff] %v514
        %v775 = vld.sshfl [vmem:[#allocation1] sm:$0xff pattern:$0x73625140]
        %777 = vrot.lane.b32.xlu0 %v775, 116
        %v778 = vpop.permute.xlu0 %777
        %v780 = vsel %vm525, %v778, 0
        %v783 = vsel %vm529, %v772, 0
        %v786 = vsel %vm529, %v773, 0
        %788 = vmatpush.bf16.msra.mxu0 0
        %789 = vmatpush.bf16.msra.mxu0 0
        %790 = vmatpush.bf16.msra.mxu0 0
        %791 = vmatpush.bf16.msra.mxu0 0
        %792 = vmatpush.bf16.msra.mxu0 0
        %793 = vmatpush.bf16.msra.mxu0 0
        %794 = vmatpush.bf16.msra.mxu0 0
        %795 = vmatpush.bf16.msra.mxu0 %v783
        %796 = vmatmul.bf16.gmra.mxu0 %v780
        %v797 = vpop.f32.mrf.mxu0
        %v798 = vadd.f32 0.0, %v797
        %v799 = vpop.f32.mrf.mxu0
        %800 = vdwg.mxu0
        %801 = vmatpush.bf16.msra.mxu0 0
        %802 = vmatpush.bf16.msra.mxu0 0
        %803 = vmatpush.bf16.msra.mxu0 0
        %804 = vmatpush.bf16.msra.mxu0 0
        %805 = vmatpush.bf16.msra.mxu0 0
        %806 = vmatpush.bf16.msra.mxu0 0
        %807 = vmatpush.bf16.msra.mxu0 0
        %808 = vmatpush.bf16.msra.mxu0 %v786
        %809 = vmatmul.bf16.gmra.mxu0 %v780
        %v810 = vpop.f32.mrf.mxu0
        %v811 = vadd.f32 0.0, %v810
        %v812 = vpop.f32.mrf.mxu0
        %813 = vdwg.mxu0
        %v814 = vadd.f32 %v770, %v798
        %v815 = vadd.f32 %v771, %v811
        %v816 = vpack.c.bf16 %v489, %v489
        %v817 = vpack.c.bf16 %v490, %v490
        %818 = vst [vmem:[#allocation1] ss:$4 sm:$0xff] %v514
        %v819 = vld.sshfl [vmem:[#allocation1] sm:$0xff pattern:$0x73625140]
        %821 = vrot.lane.b32.xlu0 %v819, 114
        %v822 = vpop.permute.xlu0 %821
        %v824 = vsel %vm525, %v822, 0
        %v827 = vsel %vm529, %v816, 0
        %v830 = vsel %vm529, %v817, 0
        %832 = vmatpush.bf16.msra.mxu0 0
        %833 = vmatpush.bf16.msra.mxu0 0
        %834 = vmatpush.bf16.msra.mxu0 0
        %835 = vmatpush.bf16.msra.mxu0 0
        %836 = vmatpush.bf16.msra.mxu0 0
        %837 = vmatpush.bf16.msra.mxu0 0
        %838 = vmatpush.bf16.msra.mxu0 0
        %839 = vmatpush.bf16.msra.mxu0 %v827
        %840 = vmatmul.bf16.gmra.mxu0 %v824
        %v841 = vpop.f32.mrf.mxu0
        %v842 = vadd.f32 0.0, %v841
        %v843 = vpop.f32.mrf.mxu0
        %844 = vdwg.mxu0
        %845 = vmatpush.bf16.msra.mxu0 0
        %846 = vmatpush.bf16.msra.mxu0 0
        %847 = vmatpush.bf16.msra.mxu0 0
        %848 = vmatpush.bf16.msra.mxu0 0
        %849 = vmatpush.bf16.msra.mxu0 0
        %850 = vmatpush.bf16.msra.mxu0 0
        %851 = vmatpush.bf16.msra.mxu0 0
        %852 = vmatpush.bf16.msra.mxu0 %v830
        %853 = vmatmul.bf16.gmra.mxu0 %v824
        %v854 = vpop.f32.mrf.mxu0
        %v855 = vadd.f32 0.0, %v854
        %v856 = vpop.f32.mrf.mxu0
        %857 = vdwg.mxu0
        %v858 = vadd.f32 %v814, %v842
        %v859 = vadd.f32 %v815, %v855
        %v860 = vpack.c.bf16 %v512, %v512
        %v861 = vpack.c.bf16 %v513, %v513
        %862 = vst [vmem:[#allocation1] ss:$4 sm:$0xff] %v514
        %v863 = vld.sshfl [vmem:[#allocation1] sm:$0xff pattern:$0x73625140]
        %865 = vrot.lane.b32.xlu0 %v863, 112
        %v866 = vpop.permute.xlu0 %865
        %v868 = vsel %vm525, %v866, 0
        %v871 = vsel %vm529, %v860, 0
        %v874 = vsel %vm529, %v861, 0
        %876 = vmatpush.bf16.msra.mxu0 0
        %877 = vmatpush.bf16.msra.mxu0 0
        %878 = vmatpush.bf16.msra.mxu0 0
        %879 = vmatpush.bf16.msra.mxu0 0
        %880 = vmatpush.bf16.msra.mxu0 0
        %881 = vmatpush.bf16.msra.mxu0 0
        %882 = vmatpush.bf16.msra.mxu0 0
        %883 = vmatpush.bf16.msra.mxu0 %v871
        %884 = vmatmul.bf16.gmra.mxu0 %v868
        %v885 = vpop.f32.mrf.mxu0
        %v886 = vadd.f32 0.0, %v885
        %v887 = vpop.f32.mrf.mxu0
        %888 = vdwg.mxu0
        %889 = vmatpush.bf16.msra.mxu0 0
        %890 = vmatpush.bf16.msra.mxu0 0
        %891 = vmatpush.bf16.msra.mxu0 0
        %892 = vmatpush.bf16.msra.mxu0 0
        %893 = vmatpush.bf16.msra.mxu0 0
        %894 = vmatpush.bf16.msra.mxu0 0
        %895 = vmatpush.bf16.msra.mxu0 0
        %896 = vmatpush.bf16.msra.mxu0 %v874
        %897 = vmatmul.bf16.gmra.mxu0 %v868
        %v898 = vpop.f32.mrf.mxu0
        %v899 = vadd.f32 0.0, %v898
        %v900 = vpop.f32.mrf.mxu0
        %901 = vdwg.mxu0
        %v902 = vadd.f32 %v858, %v886
        %v903 = vadd.f32 %v859, %v899
        %v904 = vld [vmem:[%s4] sm:$0xf]
        %906 = vset.pattern.permute.xlu0 0
        %907 = vperm.xlu0 %906, %v904
        %v908 = vpop.permute.xlu0 %907
        %v910 = vadd.f32 %v902, %v908
        %v911 = vadd.f32 %v903, %v908
        %vm912 = vcmp.ge.f32.partialorder %v910, 0.0
        %vm913 = vcmp.ge.f32.partialorder %v911, 0.0
        %v914 = vmul.f32 %v910, 0.1
        %v915 = vmul.f32 %v911, 0.1
        %v916 = vsel %vm912, %v910, %v914
        %v917 = vsel %vm913, %v911, %v915
        %918 = vst [vmem:[#allocation1] ss:$2 sm:$0xff] %v244
        %v919 = vld.sshfl [vmem:[#allocation1] sm:$0xff pattern:$0x75316420]
        %v920 = vld.sshfl [vmem:[#allocation1 + $0x8] sm:$0xff pattern:$0x75316420]
        %v923 = vadd.f32 %v916, %v919
        %v924 = vadd.f32 %v917, %v920
        %v927 = vrot.slane %v924, 4
        %vm928 = vcmask 1043456
        %v929 = vsel %vm928, %v923, %v927
        %931 = vst [vmem:[%s242] sm:$0xff] %v929
        %s932 = sand.u32 %s140, 1
        %s933 = scalar_lea.sflag [#allocation4], %s932
        %s934 = sand.u32 %s140, 1
        %s935 = smul.addr %s934, 8
        %s936 = scalar_lea.vmem [#allocation5], %s935
        // Predicated region
        $region45: #{tpu_custom_call.1} parent=39 // pred_check
          %p937 = pneg %p150
        $region46: #{tpu_custom_call.1} parent=39 // pred_check_branch
          %939 = sbr.rel (%p937) target = $region48
        $region47: #{tpu_custom_call.1} parent=39 // pred_region
          %941 = vsyncadd %s933, 0
          %s942 = smul.addr %s22, 2
          %s943 = smul.addr %s942, 4
          %s944 = scalar_lea.hbm %s5, %s943
          %s946 = sshll.u32 %s936, 4
          %s947 = int_to_ptr.vmem [resolvable:$true] %s946
          %s948 = sshll.u32 %s944, 4
          %s949 = int_to_ptr.hbm [resolvable:$true] %s948
          %951 = dma.vmem_to_hbm [thread:$0]  %s947, 128, %s949, %s933
        $region48: #{tpu_custom_call.1} parent=39 // pred_fallthru
          _
      $region40: #{tpu_custom_call.1} parent=5 // pred_fallthru
        _
      %p952 = scmp.le.s32.totalorder 2, %s17
      // Predicated region
      $region49: #{tpu_custom_call.1} parent=5 // pred_check
        %p953 = pneg %p952
      $region50: #{tpu_custom_call.1} parent=5 // pred_check_branch
        %955 = sbr.rel (%p953) target = $region52
      $region51: #{tpu_custom_call.1} parent=5 // pred_region
        %s956 = ssub.s32 %s17, 2
        // Predicated region
        $region53: #{tpu_custom_call.1} parent=51 // pred_check
          %p957 = pneg %p156
        $region54: #{tpu_custom_call.1} parent=51 // pred_check_branch
          %959 = sbr.rel (%p957) target = $region56
        $region55: #{tpu_custom_call.1} parent=51 // pred_region
          %s960 = sand.u32 %s141, 1
          %s961 = scalar_lea.sflag [#allocation4], %s960
          %s962 = sand.u32 %s141, 1
          %s963 = smul.addr %s962, 8
          %s964 = scalar_lea.vmem [#allocation5], %s963
          %966 = dma.done %s961, 128
        $region56: #{tpu_custom_call.1} parent=51 // pred_fallthru
          _
      $region52: #{tpu_custom_call.1} parent=5 // pred_fallthru
        _
    $region6: #{tpu_custom_call.1} parent=1 // loop_footer
      %s21 = sadd.s32 1, %s17
    $region7: #{tpu_custom_call.1} parent=1 // loop_footer_branch
      %16 = sbr.rel target = $region3
    $region8: #{tpu_custom_call.1} parent=1 // loop_exit
      _
    %967 = vsyncpa [#allocation3], 1
    %s968 = scalar_lea.sflag [#allocation3], 1
    %969 = vsyncpa %s968, 1
    %970 = vsyncpa [#allocation4], 1
    %s971 = scalar_lea.sflag [#allocation4], 1
    %972 = vsyncpa %s971, 1

</llo_original>
